<compile_context>
chip_gen: v7x
topology: tpu7x:2x2x1
jax: 0.10.0
libtpu: 0.0.40
codegen_flags: <defaults>
</compile_context>

<pallas_src>
import functools

import jax
import jax.numpy as jnp
from jax import lax
from jax.experimental import pallas as pl
from jax.experimental.pallas import tpu as pltpu

_LANES = 128
_SUBLANES = 8
_INV_SQRT2 = 0.7071067811865476
_SQRT_2_OVER_PI = 0.7978845608028654


def _round_up(n, m):
    return ((n + m - 1) // m) * m


# --------------------------------------------------------------------------- #
# GELU variants (built only from ops with guaranteed Mosaic lowerings).
# --------------------------------------------------------------------------- #
def _erf_poly(x):
    # Abramowitz & Stegun 7.1.26, |abs err| <= 1.5e-7.  Avoids relying on a
    # native lax.erf lowering; the transcendental is a single EUP exp.
    ax = jnp.abs(x)
    t = 1.0 / (1.0 + 0.3275911 * ax)
    poly = ((((1.061405429 * t - 1.453152027) * t + 1.421413741) * t
             - 0.284496736) * t + 0.254829592) * t
    y = 1.0 - poly * jnp.exp(-ax * ax)
    return jnp.where(x >= 0, y, -y)


def _gelu(x, exact):
    if exact:  # matches PyTorch F.gelu default (erf formulation)
        return 0.5 * x * (1.0 + _erf_poly(x * _INV_SQRT2))
    # tanh approximation: cheaper VALU chain, tanh goes to the EUP slot.
    # Numerics tradeoff vs the exact-erf PyTorch default (|err| ~ 1e-3).
    inner = _SQRT_2_OVER_PI * (x + 0.044715 * x * x * x)
    return 0.5 * x * (1.0 + jnp.tanh(inner))


# --------------------------------------------------------------------------- #
# Kernel: the whole MLP in one body. All operands live in VMEM.
# --------------------------------------------------------------------------- #
def _fused_mlp_kernel(x_ref, wh_ref, bh_ref, g_ref, beta_ref, s_ref,
                      wo_ref, bo_ref, o_ref, *, num_hidden, eps, gelu_exact):
    x = x_ref[...].astype(jnp.float32)            # (tm, P); every lane is real data
    gamma = g_ref[...].astype(jnp.float32)        # (1, P) lane-tiled
    beta = beta_ref[...].astype(jnp.float32)      # (1, P) lane-tiled
    seg = s_ref[...]                              # (P, P) block-diag ones(d,d)/d, f32

    for l in range(num_hidden):                   # tiny static unroll
        w = wh_ref[l]                             # (P, P), pre-cast to MXU dtype
        b = bh_ref[l].astype(jnp.float32)         # (1, P)
        h = jnp.dot(x.astype(w.dtype), w,
                    preferred_element_type=jnp.float32) + b
        h = _gelu(h, gelu_exact)
        # Shared LayerNorm over each logical row's d features.  `seg` is a
        # block-diagonal averaging matrix, so one (idle-MXU) matmul yields the
        # per-group mean broadcast back to every lane of its group: no lane
        # masks, no cross-lane VPU shuffles, no padded-lane work.
        mu = jnp.dot(h, seg, preferred_element_type=jnp.float32)
        c = h - mu
        var = jnp.dot(c * c, seg, preferred_element_type=jnp.float32)
        h = c * lax.rsqrt(var + eps) * gamma + beta
        x = h + x                                 # residual (hidden dim == fan_in)
        # dropout: p = 0.0 / eval mode -> identity.
        # TODO(synk): training-mode dropout (p > 0) is not implemented.

    wo = wo_ref[...]                              # (P, Pout), block-diag, MXU dtype
    out = jnp.dot(x.astype(wo.dtype), wo, preferred_element_type=jnp.float32)
    out = out + bo_ref[...].astype(jnp.float32)
    o_ref[...] = out.astype(o_ref.dtype)


# --------------------------------------------------------------------------- #
# Parameter preparation (one-time, outside the hot path)
# --------------------------------------------------------------------------- #
def prepare_params(raw, mxu_dtype=jnp.bfloat16):
    """Pack parameters into the 4-rows-per-vreg block-diagonal layout.

    With d = fan_in = hidden_dim and pack = 128 // d logical rows per 128-lane
    vreg: every (d,d) weight -> block-diagonal (pack*d, pack*d) with `pack`
    copies; biases / gamma / beta are lane-tiled; `s` is the constant
    block-diagonal averaging matrix for the segmented LayerNorm reduction.
    Weights are pre-cast to the MXU dtype here (no casts inside the kernel).
    """
    d = raw["hidden"][0][0].shape[0]
    for (w, b) in raw["hidden"]:
        assert w.shape == (d, d) and b.shape == (d,), (
            "residual + shared LayerNorm require every hidden dim == fan_in")
    w_o, b_o = raw["out"]
    assert w_o.shape[0] == d
    assert raw["gamma"].shape == (d,) and raw["beta"].shape == (d,)

    pack = _LANES // d if (d <= _LANES and _LANES % d == 0) else 1
    eye = jnp.eye(pack, dtype=jnp.float32)

    def bdiag(w):
        return jnp.kron(eye, w.astype(jnp.float32))

    def tile_row(v):
        return jnp.tile(v.astype(jnp.float32), pack)[None, :]

    wh = jnp.stack([bdiag(w) for (w, _) in raw["hidden"]]).astype(mxu_dtype)
    bh = jnp.stack([tile_row(b) for (_, b) in raw["hidden"]])
    seg = jnp.kron(eye, jnp.full((d, d), 1.0 / d, jnp.float32))
    return {
        "wh": wh,                              # (nh, P, P)        mxu_dtype
        "bh": bh,                              # (nh, 1, P)        f32
        "gamma": tile_row(raw["gamma"]),       # (1, P)            f32
        "beta": tile_row(raw["beta"]),         # (1, P)            f32
        "s": seg,                              # (P, P)            f32
        "wo": bdiag(w_o).astype(mxu_dtype),    # (P, pack*fan_out) mxu_dtype
        "bo": tile_row(b_o),                   # (1, pack*fan_out) f32
    }


# --------------------------------------------------------------------------- #
# Forward wrapper
# --------------------------------------------------------------------------- #
@functools.partial(jax.jit, static_argnames=("fan_in", "fan_out", "eps",
                                             "out_dtype", "gelu_exact",
                                             "block_rows"))
def mlp_forward(x, params, *, fan_in, fan_out, eps, out_dtype=None,
                gelu_exact=True, block_rows=1024):
    """x: (B, fan_in) in f32 or bf16. Returns (B, fan_out) in out_dtype."""
    B, d = x.shape
    assert d == fan_in
    P = params["wh"].shape[-1]
    pack = P // d
    assert pack * d == P
    Pout = params["wo"].shape[-1]
    assert Pout == pack * fan_out
    nh = int(params["wh"].shape[0])
    odt = x.dtype if out_dtype is None else out_dtype

    # Pack `pack` logical rows per 128-lane vreg. Row-major reshape is free
    # (no extra HBM pass); row padding only happens when B % pack != 0.
    B4 = _round_up(B, pack)
    xp = x if B4 == B else jnp.pad(x, ((0, B4 - B), (0, 0)))
    R = B4 // pack
    xr = xp.reshape(R, P)

    kernel = functools.partial(_fused_mlp_kernel, num_hidden=nh,
                               eps=float(eps), gelu_exact=gelu_exact)
    args = (xr, params["wh"], params["bh"], params["gamma"], params["beta"],
            params["s"], params["wo"], params["bo"])

    if B <= 256:
        # Small batch: single invocation, whole arrays resident in VMEM.
        out = pl.pallas_call(
            kernel,
            out_shape=jax.ShapeDtypeStruct((R, Pout), odt),
            in_specs=[pl.BlockSpec(memory_space=pltpu.MemorySpace.VMEM)] * 8,
            out_specs=pl.BlockSpec(memory_space=pltpu.MemorySpace.VMEM),
        )(*args)
    else:
        # Tiled batch: >= 2 "parallel" blocks so v7x can use both TensorCores;
        # weights stay on block (0, ...) every iteration (no re-DMA).
        block = max(_SUBLANES,
                    min(block_rows, _round_up(pl.cdiv(R, 2), _SUBLANES)))
        grid = (pl.cdiv(R, block),)
        out = pl.pallas_call(
            kernel,
            out_shape=jax.ShapeDtypeStruct((R, Pout), odt),
            grid=grid,
            in_specs=[
                pl.BlockSpec((block, P), lambda i: (i, 0)),
                pl.BlockSpec((nh, P, P), lambda i: (0, 0, 0)),
                pl.BlockSpec((nh, 1, P), lambda i: (0, 0, 0)),
                pl.BlockSpec((1, P), lambda i: (0, 0)),
                pl.BlockSpec((1, P), lambda i: (0, 0)),
                pl.BlockSpec((P, P), lambda i: (0, 0)),
                pl.BlockSpec((P, Pout), lambda i: (0, 0)),
                pl.BlockSpec((1, Pout), lambda i: (0, 0)),
            ],
            out_specs=pl.BlockSpec((block, Pout), lambda i: (i, 0)),
            compiler_params=pltpu.CompilerParams(
                dimension_semantics=("parallel",)),
        )(*args)

    out = out.reshape(B4, fan_out)   # free row-major unpack
    return out if B4 == B else out[:B]


# --------------------------------------------------------------------------- #
# Parameter init (PyTorch nn.Linear-style) and pure-JAX reference
# --------------------------------------------------------------------------- #
def init_params(key, fan_in, hidden_dims, fan_out, dtype=jnp.float32):
    raw = {"hidden": [], "gamma": None, "beta": None, "out": None}
    d_in = fan_in
    for d_out in hidden_dims:
        key, kw, kb = jax.random.split(key, 3)
        bound = 1.0 / (d_in ** 0.5)
        w = jax.random.uniform(kw, (d_in, d_out), dtype, -bound, bound)  # [in, out]
        b = jax.random.uniform(kb, (d_out,), dtype, -bound, bound)
        raw["hidden"].append((w, b))
        d_in = d_out
    # one shared LayerNorm (built on the final hidden dim), as in the module
    raw["gamma"] = jnp.ones((d_in,), dtype)
    raw["beta"] = jnp.zeros((d_in,), dtype)
    key, kw, kb = jax.random.split(key, 3)
    bound = 1.0 / (d_in ** 0.5)
    w_o = jax.random.uniform(kw, (d_in, fan_out), dtype, -bound, bound)
    b_o = jax.random.uniform(kb, (fan_out,), dtype, -bound, bound)
    raw["out"] = (w_o, b_o)
    return raw


def mlp_reference(x, raw, eps):
    gamma, beta = raw["gamma"], raw["beta"]
    h = x
    for (w, b) in raw["hidden"]:
        out = jnp.dot(h, w, precision=lax.Precision.HIGHEST) + b
        out = 0.5 * out * (1.0 + lax.erf(out * _INV_SQRT2))   # exact GELU
        mu = jnp.mean(out, axis=-1, keepdims=True)
        var = jnp.mean((out - mu) ** 2, axis=-1, keepdims=True)
        out = (out - mu) * lax.rsqrt(var + eps)
        out = out * gamma + beta
        h = out + h
    w_o, b_o = raw["out"]
    return jnp.dot(h, w_o, precision=lax.Precision.HIGHEST) + b_o


if __name__ == "__main__":
    batch = 8
    fan_in = 32
    hidden_dims = [32, 32]
    fan_out = 32
    norm_eps = 1e-5

    key = jax.random.PRNGKey(0)
    key, kx = jax.random.split(key)
    x = jax.random.normal(kx, (batch, fan_in), jnp.float32)

    raw = init_params(key, fan_in, hidden_dims, fan_out)
    ref = mlp_reference(x, raw, norm_eps)

    # 1) Validation path: f32 weights in the MXU, exact (erf) GELU, f32 I/O.
    p_f32 = prepare_params(raw, mxu_dtype=jnp.float32)
    out = mlp_forward(x, p_f32, fan_in=fan_in, fan_out=fan_out, eps=norm_eps,
                      gelu_exact=True)
    out = jax.block_until_ready(out)
    assert out.shape == (batch, fan_out), out.shape
    assert jnp.allclose(out, ref, rtol=3e-2, atol=3e-2), \
        float(jnp.max(jnp.abs(out - ref)))

    # 2) Production path: bf16 weights, bf16 activation I/O, tanh GELU.
    p_bf16 = prepare_params(raw, mxu_dtype=jnp.bfloat16)
    out_p = mlp_forward(x.astype(jnp.bfloat16), p_bf16, fan_in=fan_in,
                        fan_out=fan_out, eps=norm_eps,
                        out_dtype=jnp.bfloat16, gelu_exact=False)
    out_p = jax.block_until_ready(out_p)
    assert out_p.shape == (batch, fan_out) and out_p.dtype == jnp.bfloat16
    out_pf = out_p.astype(jnp.float32)
    assert jnp.all(jnp.isfinite(out_pf))
    assert jnp.allclose(out_pf, ref, rtol=1e-1, atol=1e-1)

    # 3) Larger batch: exercises the tiled grid path (2 "parallel" 512-row
    #    packed blocks -> both TensorCores on v7x).
    key, kb = jax.random.split(key)
    xb = jax.random.normal(kb, (4096, fan_in), jnp.float32)
    refb = mlp_reference(xb, raw, norm_eps)

    outb = mlp_forward(xb, p_f32, fan_in=fan_in, fan_out=fan_out, eps=norm_eps,
                       gelu_exact=True)
    outb = jax.block_until_ready(outb)
    assert outb.shape == (4096, fan_out), outb.shape
    assert jnp.allclose(outb, refb, rtol=3e-2, atol=3e-2)

    outb_p = mlp_forward(xb.astype(jnp.bfloat16), p_bf16, fan_in=fan_in,
                         fan_out=fan_out, eps=norm_eps,
                         out_dtype=jnp.bfloat16, gelu_exact=False)
    outb_p = jax.block_until_ready(outb_p)
    assert jnp.all(jnp.isfinite(outb_p.astype(jnp.float32)))
    assert jnp.allclose(outb_p.astype(jnp.float32), refb, rtol=1e-1, atol=1e-1)

    print("KERNEL_OK")
</pallas_src>

<mosaic_0001>
module attributes {stable_mosaic.version = 11 : i64} {
  func.func @_fused_mlp_kernel(%arg0: memref<2x128xf32, #tpu.memory_space<vmem>>, %arg1: memref<2x128x128xf32, #tpu.memory_space<vmem>>, %arg2: memref<2x1x128xf32, #tpu.memory_space<vmem>>, %arg3: memref<1x128xf32, #tpu.memory_space<vmem>>, %arg4: memref<1x128xf32, #tpu.memory_space<vmem>>, %arg5: memref<128x128xf32, #tpu.memory_space<vmem>>, %arg6: memref<128x128xf32, #tpu.memory_space<vmem>>, %arg7: memref<1x128xf32, #tpu.memory_space<vmem>>, %arg8: memref<2x128xf32, #tpu.memory_space<vmem>>) attributes {dimension_semantics = [], scalar_prefetch = 0 : i64, scratch_operands = 0 : i64, tpu.core_type = #tpu.core_type<tc>} {
    %c0 = arith.constant 0 : index
    %c0_0 = arith.constant 0 : index
    %0 = vector.load %arg0[%c0, %c0_0] : memref<2x128xf32, #tpu.memory_space<vmem>>, vector<2x128xf32>
    %c0_1 = arith.constant 0 : index
    %c0_2 = arith.constant 0 : index
    %1 = vector.load %arg3[%c0_1, %c0_2] : memref<1x128xf32, #tpu.memory_space<vmem>>, vector<1x128xf32>
    %c0_3 = arith.constant 0 : index
    %c0_4 = arith.constant 0 : index
    %2 = vector.load %arg4[%c0_3, %c0_4] : memref<1x128xf32, #tpu.memory_space<vmem>>, vector<1x128xf32>
    %c0_5 = arith.constant 0 : index
    %c0_6 = arith.constant 0 : index
    %3 = vector.load %arg5[%c0_5, %c0_6] : memref<128x128xf32, #tpu.memory_space<vmem>>, vector<128x128xf32>
    %c0_7 = arith.constant 0 : index
    %c0_8 = arith.constant 0 : index
    %c0_9 = arith.constant 0 : index
    %4 = vector.load %arg1[%c0_7, %c0_8, %c0_9] : memref<2x128x128xf32, #tpu.memory_space<vmem>>, vector<1x128x128xf32>
    %5 = vector.shape_cast %4 : vector<1x128x128xf32> to vector<128x128xf32>
    %c0_10 = arith.constant 0 : index
    %c0_11 = arith.constant 0 : index
    %c0_12 = arith.constant 0 : index
    %6 = vector.load %arg2[%c0_10, %c0_11, %c0_12] : memref<2x1x128xf32, #tpu.memory_space<vmem>>, vector<1x1x128xf32>
    %7 = vector.shape_cast %6 : vector<1x1x128xf32> to vector<1x128xf32>
    %cst = arith.constant dense<0.000000e+00> : vector<2x128xf32>
    %8 = tpu.matmul %0, %5, %cst {dimension_numbers = #tpu.dot_dimension_numbers<[1], [0], [0], [1], [0, 0, 1, 1], [], []>} : vector<2x128xf32>, vector<128x128xf32>, vector<2x128xf32> -> vector<2x128xf32>
    %9 = vector.broadcast %7 : vector<1x128xf32> to vector<2x128xf32>
    %10 = arith.addf %8, %9 : vector<2x128xf32>
    %cst_13 = arith.constant 5.000000e-01 : f32
    %11 = vector.broadcast %cst_13 : f32 to vector<2x128xf32>
    %12 = arith.mulf %11, %10 : vector<2x128xf32>
    %cst_14 = arith.constant 0.707106769 : f32
    %13 = vector.broadcast %cst_14 : f32 to vector<2x128xf32>
    %14 = arith.mulf %10, %13 : vector<2x128xf32>
    %15 = math.absf %14 : vector<2x128xf32>
    %cst_15 = arith.constant 0.327591091 : f32
    %16 = vector.broadcast %cst_15 : f32 to vector<2x128xf32>
    %17 = arith.mulf %16, %15 : vector<2x128xf32>
    %cst_16 = arith.constant 1.000000e+00 : f32
    %18 = vector.broadcast %cst_16 : f32 to vector<2x128xf32>
    %19 = arith.addf %18, %17 : vector<2x128xf32>
    %cst_17 = arith.constant 1.000000e+00 : f32
    %20 = vector.broadcast %cst_17 : f32 to vector<2x128xf32>
    %21 = arith.divf %20, %19 : vector<2x128xf32>
    %cst_18 = arith.constant 1.06140542 : f32
    %22 = vector.broadcast %cst_18 : f32 to vector<2x128xf32>
    %23 = arith.mulf %22, %21 : vector<2x128xf32>
    %cst_19 = arith.constant 1.45315206 : f32
    %24 = vector.broadcast %cst_19 : f32 to vector<2x128xf32>
    %25 = arith.subf %23, %24 : vector<2x128xf32>
    %26 = arith.mulf %25, %21 : vector<2x128xf32>
    %cst_20 = arith.constant 1.42141378 : f32
    %27 = vector.broadcast %cst_20 : f32 to vector<2x128xf32>
    %28 = arith.addf %26, %27 : vector<2x128xf32>
    %29 = arith.mulf %28, %21 : vector<2x128xf32>
    %cst_21 = arith.constant 0.284496725 : f32
    %30 = vector.broadcast %cst_21 : f32 to vector<2x128xf32>
    %31 = arith.subf %29, %30 : vector<2x128xf32>
    %32 = arith.mulf %31, %21 : vector<2x128xf32>
    %cst_22 = arith.constant 0.254829586 : f32
    %33 = vector.broadcast %cst_22 : f32 to vector<2x128xf32>
    %34 = arith.addf %32, %33 : vector<2x128xf32>
    %35 = arith.mulf %34, %21 : vector<2x128xf32>
    %cst_23 = arith.constant 0.000000e+00 : f32
    %36 = vector.broadcast %cst_23 : f32 to vector<2x128xf32>
    %37 = arith.subf %36, %15 : vector<2x128xf32>
    %38 = arith.mulf %37, %15 : vector<2x128xf32>
    %39 = math.exp %38 : vector<2x128xf32>
    %40 = arith.mulf %35, %39 : vector<2x128xf32>
    %cst_24 = arith.constant 1.000000e+00 : f32
    %41 = vector.broadcast %cst_24 : f32 to vector<2x128xf32>
    %42 = arith.subf %41, %40 : vector<2x128xf32>
    %cst_25 = arith.constant 0.000000e+00 : f32
    %43 = vector.broadcast %cst_25 : f32 to vector<2x128xf32>
    %44 = arith.cmpf oge, %14, %43 : vector<2x128xf32>
    %cst_26 = arith.constant 0.000000e+00 : f32
    %45 = vector.broadcast %cst_26 : f32 to vector<2x128xf32>
    %46 = arith.subf %45, %42 : vector<2x128xf32>
    %47 = arith.select %44, %42, %46 : vector<2x128xi1>, vector<2x128xf32>
    %cst_27 = arith.constant 1.000000e+00 : f32
    %48 = vector.broadcast %cst_27 : f32 to vector<2x128xf32>
    %49 = arith.addf %48, %47 : vector<2x128xf32>
    %50 = arith.mulf %12, %49 : vector<2x128xf32>
    %cst_28 = arith.constant dense<0.000000e+00> : vector<2x128xf32>
    %51 = tpu.matmul %50, %3, %cst_28 {dimension_numbers = #tpu.dot_dimension_numbers<[1], [0], [0], [1], [0, 0, 1, 1], [], []>} : vector<2x128xf32>, vector<128x128xf32>, vector<2x128xf32> -> vector<2x128xf32>
    %52 = arith.subf %50, %51 : vector<2x128xf32>
    %53 = arith.mulf %52, %52 : vector<2x128xf32>
    %cst_29 = arith.constant dense<0.000000e+00> : vector<2x128xf32>
    %54 = tpu.matmul %53, %3, %cst_29 {dimension_numbers = #tpu.dot_dimension_numbers<[1], [0], [0], [1], [0, 0, 1, 1], [], []>} : vector<2x128xf32>, vector<128x128xf32>, vector<2x128xf32> -> vector<2x128xf32>
    %cst_30 = arith.constant 9.99999974E-6 : f32
    %55 = vector.broadcast %cst_30 : f32 to vector<2x128xf32>
    %56 = arith.addf %54, %55 : vector<2x128xf32>
    %57 = math.rsqrt %56 : vector<2x128xf32>
    %58 = arith.mulf %52, %57 : vector<2x128xf32>
    %59 = vector.broadcast %1 : vector<1x128xf32> to vector<2x128xf32>
    %60 = arith.mulf %58, %59 : vector<2x128xf32>
    %61 = vector.broadcast %2 : vector<1x128xf32> to vector<2x128xf32>
    %62 = arith.addf %60, %61 : vector<2x128xf32>
    %63 = arith.addf %62, %0 : vector<2x128xf32>
    %c1 = arith.constant 1 : index
    %c0_31 = arith.constant 0 : index
    %c0_32 = arith.constant 0 : index
    %64 = vector.load %arg1[%c1, %c0_31, %c0_32] : memref<2x128x128xf32, #tpu.memory_space<vmem>>, vector<1x128x128xf32>
    %65 = vector.shape_cast %64 : vector<1x128x128xf32> to vector<128x128xf32>
    %c1_33 = arith.constant 1 : index
    %c0_34 = arith.constant 0 : index
    %c0_35 = arith.constant 0 : index
    %66 = vector.load %arg2[%c1_33, %c0_34, %c0_35] : memref<2x1x128xf32, #tpu.memory_space<vmem>>, vector<1x1x128xf32>
    %67 = vector.shape_cast %66 : vector<1x1x128xf32> to vector<1x128xf32>
    %cst_36 = arith.constant dense<0.000000e+00> : vector<2x128xf32>
    %68 = tpu.matmul %63, %65, %cst_36 {dimension_numbers = #tpu.dot_dimension_numbers<[1], [0], [0], [1], [0, 0, 1, 1], [], []>} : vector<2x128xf32>, vector<128x128xf32>, vector<2x128xf32> -> vector<2x128xf32>
    %69 = vector.broadcast %67 : vector<1x128xf32> to vector<2x128xf32>
    %70 = arith.addf %68, %69 : vector<2x128xf32>
    %cst_37 = arith.constant 5.000000e-01 : f32
    %71 = vector.broadcast %cst_37 : f32 to vector<2x128xf32>
    %72 = arith.mulf %71, %70 : vector<2x128xf32>
    %cst_38 = arith.constant 0.707106769 : f32
    %73 = vector.broadcast %cst_38 : f32 to vector<2x128xf32>
    %74 = arith.mulf %70, %73 : vector<2x128xf32>
    %75 = math.absf %74 : vector<2x128xf32>
    %cst_39 = arith.constant 0.327591091 : f32
    %76 = vector.broadcast %cst_39 : f32 to vector<2x128xf32>
    %77 = arith.mulf %76, %75 : vector<2x128xf32>
    %cst_40 = arith.constant 1.000000e+00 : f32
    %78 = vector.broadcast %cst_40 : f32 to vector<2x128xf32>
    %79 = arith.addf %78, %77 : vector<2x128xf32>
    %cst_41 = arith.constant 1.000000e+00 : f32
    %80 = vector.broadcast %cst_41 : f32 to vector<2x128xf32>
    %81 = arith.divf %80, %79 : vector<2x128xf32>
    %cst_42 = arith.constant 1.06140542 : f32
    %82 = vector.broadcast %cst_42 : f32 to vector<2x128xf32>
    %83 = arith.mulf %82, %81 : vector<2x128xf32>
    %cst_43 = arith.constant 1.45315206 : f32
    %84 = vector.broadcast %cst_43 : f32 to vector<2x128xf32>
    %85 = arith.subf %83, %84 : vector<2x128xf32>
    %86 = arith.mulf %85, %81 : vector<2x128xf32>
    %cst_44 = arith.constant 1.42141378 : f32
    %87 = vector.broadcast %cst_44 : f32 to vector<2x128xf32>
    %88 = arith.addf %86, %87 : vector<2x128xf32>
    %89 = arith.mulf %88, %81 : vector<2x128xf32>
    %cst_45 = arith.constant 0.284496725 : f32
    %90 = vector.broadcast %cst_45 : f32 to vector<2x128xf32>
    %91 = arith.subf %89, %90 : vector<2x128xf32>
    %92 = arith.mulf %91, %81 : vector<2x128xf32>
    %cst_46 = arith.constant 0.254829586 : f32
    %93 = vector.broadcast %cst_46 : f32 to vector<2x128xf32>
    %94 = arith.addf %92, %93 : vector<2x128xf32>
    %95 = arith.mulf %94, %81 : vector<2x128xf32>
    %cst_47 = arith.constant 0.000000e+00 : f32
    %96 = vector.broadcast %cst_47 : f32 to vector<2x128xf32>
    %97 = arith.subf %96, %75 : vector<2x128xf32>
    %98 = arith.mulf %97, %75 : vector<2x128xf32>
    %99 = math.exp %98 : vector<2x128xf32>
    %100 = arith.mulf %95, %99 : vector<2x128xf32>
    %cst_48 = arith.constant 1.000000e+00 : f32
    %101 = vector.broadcast %cst_48 : f32 to vector<2x128xf32>
    %102 = arith.subf %101, %100 : vector<2x128xf32>
    %cst_49 = arith.constant 0.000000e+00 : f32
    %103 = vector.broadcast %cst_49 : f32 to vector<2x128xf32>
    %104 = arith.cmpf oge, %74, %103 : vector<2x128xf32>
    %cst_50 = arith.constant 0.000000e+00 : f32
    %105 = vector.broadcast %cst_50 : f32 to vector<2x128xf32>
    %106 = arith.subf %105, %102 : vector<2x128xf32>
    %107 = arith.select %104, %102, %106 : vector<2x128xi1>, vector<2x128xf32>
    %cst_51 = arith.constant 1.000000e+00 : f32
    %108 = vector.broadcast %cst_51 : f32 to vector<2x128xf32>
    %109 = arith.addf %108, %107 : vector<2x128xf32>
    %110 = arith.mulf %72, %109 : vector<2x128xf32>
    %cst_52 = arith.constant dense<0.000000e+00> : vector<2x128xf32>
    %111 = tpu.matmul %110, %3, %cst_52 {dimension_numbers = #tpu.dot_dimension_numbers<[1], [0], [0], [1], [0, 0, 1, 1], [], []>} : vector<2x128xf32>, vector<128x128xf32>, vector<2x128xf32> -> vector<2x128xf32>
    %112 = arith.subf %110, %111 : vector<2x128xf32>
    %113 = arith.mulf %112, %112 : vector<2x128xf32>
    %cst_53 = arith.constant dense<0.000000e+00> : vector<2x128xf32>
    %114 = tpu.matmul %113, %3, %cst_53 {dimension_numbers = #tpu.dot_dimension_numbers<[1], [0], [0], [1], [0, 0, 1, 1], [], []>} : vector<2x128xf32>, vector<128x128xf32>, vector<2x128xf32> -> vector<2x128xf32>
    %cst_54 = arith.constant 9.99999974E-6 : f32
    %115 = vector.broadcast %cst_54 : f32 to vector<2x128xf32>
    %116 = arith.addf %114, %115 : vector<2x128xf32>
    %117 = math.rsqrt %116 : vector<2x128xf32>
    %118 = arith.mulf %112, %117 : vector<2x128xf32>
    %119 = vector.broadcast %1 : vector<1x128xf32> to vector<2x128xf32>
    %120 = arith.mulf %118, %119 : vector<2x128xf32>
    %121 = vector.broadcast %2 : vector<1x128xf32> to vector<2x128xf32>
    %122 = arith.addf %120, %121 : vector<2x128xf32>
    %123 = arith.addf %122, %63 : vector<2x128xf32>
    %c0_55 = arith.constant 0 : index
    %c0_56 = arith.constant 0 : index
    %124 = vector.load %arg6[%c0_55, %c0_56] : memref<128x128xf32, #tpu.memory_space<vmem>>, vector<128x128xf32>
    %cst_57 = arith.constant dense<0.000000e+00> : vector<2x128xf32>
    %125 = tpu.matmul %123, %124, %cst_57 {dimension_numbers = #tpu.dot_dimension_numbers<[1], [0], [0], [1], [0, 0, 1, 1], [], []>} : vector<2x128xf32>, vector<128x128xf32>, vector<2x128xf32> -> vector<2x128xf32>
    %c0_58 = arith.constant 0 : index
    %c0_59 = arith.constant 0 : index
    %126 = vector.load %arg7[%c0_58, %c0_59] : memref<1x128xf32, #tpu.memory_space<vmem>>, vector<1x128xf32>
    %127 = vector.broadcast %126 : vector<1x128xf32> to vector<2x128xf32>
    %128 = arith.addf %125, %127 : vector<2x128xf32>
    %c0_60 = arith.constant 0 : index
    %c0_61 = arith.constant 0 : index
    %129 = vector.load %arg8[%c0_60, %c0_61] : memref<2x128xf32, #tpu.memory_space<vmem>>, vector<2x128xf32>
    tpu.vector_store %arg8[%c0_60, %c0_61], %128 {strides = array<i32>} : memref<2x128xf32, #tpu.memory_space<vmem>>, vector<2x128xf32>,
    return
  }
}

</mosaic_0001>

<llo_original>
// kernel: mlp_forward.1
$region0: #{mlp_forward.1}
  #allocation0 [shape = 'u32[]', space=smem, size = 0x4, offset = 0x4, fixed_abs, tag = 'smem constant byte address 0x4 - core index']
  #allocation1 [shape = 'u32[144,128]{1,0:T(1,128)}', space=vmem, size = 0x12000, scoped, tag = 'internal scratch']
  %s0 = inlined_call_operand.vmem [shape: f32[2,128], index: 0, kind: input, shape index: {}]
  %s1 = inlined_call_operand.hbm [shape: f32[2,128,128], index: 1, kind: input, shape index: {}]
  %s2 = inlined_call_operand.vmem [shape: f32[2,1,128], index: 2, kind: input, shape index: {}]
  %s3 = inlined_call_operand.vmem [shape: f32[1,128], index: 3, kind: input, shape index: {}]
  %s4 = inlined_call_operand.vmem [shape: f32[1,128], index: 4, kind: input, shape index: {}]
  %s5 = inlined_call_operand.hbm [shape: f32[128,128], index: 5, kind: input, shape index: {}]
  %s6 = inlined_call_operand.hbm [shape: f32[128,128], index: 6, kind: input, shape index: {}]
  %s7 = inlined_call_operand.vmem [shape: f32[1,128], index: 7, kind: input, shape index: {}]
  %s8 = inlined_call_operand.vmem [shape: f32[2,128], index: 8, kind: output, shape index: {}]
  %s9 = sld [smem:[#allocation0]]
  $region54: #{mlp_forward.1} parent=0
    _
  %s11 = ssub.s32 1, %s9
  %s12 = scalar_select 0, %s11, %s9
  $region1: #{mlp_forward.1} parent=0
    #allocation2 [shape = 'u8[131072]{0}', space=vmem, size = 0x20000, scoped, tag = 'input window, operand 1, single buffered']
    #allocation3 [shape = 's32[1]{0}', space=sflag, size = 0x4, scoped, tag = 'scoped memory for mlp_forward.1']
    #allocation4 [shape = 'u8[65536]{0}', space=vmem, size = 0x10000, scoped, tag = 'input window, operand 5, single buffered']
    #allocation5 [shape = 's32[1]{0}', space=sflag, size = 0x4, scoped, tag = 'scoped memory for mlp_forward.1']
    #allocation6 [shape = 'u8[65536]{0}', space=vmem, size = 0x10000, scoped, tag = 'input window, operand 6, single buffered']
    %13 = vsyncpa [#allocation3], 0
    %14 = vsyncpa [#allocation5], 0
    // Predicated region
    $region2: #{mlp_forward.1} parent=1 // pred_check
      _
    $region3: #{mlp_forward.1} parent=1 // pred_check_branch
      %16 = sbr.rel (0) target = $region5
    $region4: #{mlp_forward.1} parent=1 // pred_region
      _
    $region5: #{mlp_forward.1} parent=1 // pred_fallthru
      _
    // Predicated region
    $region6: #{mlp_forward.1} parent=1 // pred_check
      _
    $region7: #{mlp_forward.1} parent=1 // pred_check_branch
      %18 = sbr.rel (0) target = $region9
    $region8: #{mlp_forward.1} parent=1 // pred_region
      %s20 = ssub.s32 4096, 4096
      %21 = vsyncadd [#allocation3], %s20
      %s22 = sshll.u32 [#allocation2], 4
      %s23 = int_to_ptr.vmem [resolvable:$true] %s22
      %28 = dma.hbm_to_vmem [thread:$0]  %s1, 4096, %s23, [#allocation3], 128, 128, 8
    $region9: #{mlp_forward.1} parent=1 // pred_fallthru
      _
    // Predicated region
    $region10: #{mlp_forward.1} parent=1 // pred_check
      _
    $region11: #{mlp_forward.1} parent=1 // pred_check_branch
      %30 = sbr.rel (0) target = $region13
    $region12: #{mlp_forward.1} parent=1 // pred_region
      _
    $region13: #{mlp_forward.1} parent=1 // pred_fallthru
      _
    // Predicated region
    $region14: #{mlp_forward.1} parent=1 // pred_check
      _
    $region15: #{mlp_forward.1} parent=1 // pred_check_branch
      %32 = sbr.rel (0) target = $region17
    $region16: #{mlp_forward.1} parent=1 // pred_region
      _
    $region17: #{mlp_forward.1} parent=1 // pred_fallthru
      _
    // Predicated region
    $region18: #{mlp_forward.1} parent=1 // pred_check
      _
    $region19: #{mlp_forward.1} parent=1 // pred_check_branch
      %34 = sbr.rel (0) target = $region21
    $region20: #{mlp_forward.1} parent=1 // pred_region
      _
    $region21: #{mlp_forward.1} parent=1 // pred_fallthru
      _
    // Predicated region
    $region22: #{mlp_forward.1} parent=1 // pred_check
      _
    $region23: #{mlp_forward.1} parent=1 // pred_check_branch
      %36 = sbr.rel (0) target = $region25
    $region24: #{mlp_forward.1} parent=1 // pred_region
      %s38 = ssub.s32 2048, 2048
      %39 = vsyncadd [#allocation5], %s38
      %s40 = sshll.u32 [#allocation4], 4
      %s41 = int_to_ptr.vmem [resolvable:$true] %s40
      %46 = dma.hbm_to_vmem [thread:$0]  %s5, 2048, %s41, [#allocation5], 128, 128, 8
    $region25: #{mlp_forward.1} parent=1 // pred_fallthru
      _
    // Predicated region
    $region26: #{mlp_forward.1} parent=1 // pred_check
      _
    $region27: #{mlp_forward.1} parent=1 // pred_check_branch
      %48 = sbr.rel (0) target = $region29
    $region28: #{mlp_forward.1} parent=1 // pred_region
      %s50 = ssub.s32 2048, 2048
      %51 = vsyncadd [#allocation5], %s50
      %s52 = sshll.u32 [#allocation6], 4
      %s53 = int_to_ptr.vmem [resolvable:$true] %s52
      %58 = dma.hbm_to_vmem [thread:$0]  %s6, 2048, %s53, [#allocation5], 128, 128, 8
    $region29: #{mlp_forward.1} parent=1 // pred_fallthru
      _
    // Predicated region
    $region30: #{mlp_forward.1} parent=1 // pred_check
      _
    $region31: #{mlp_forward.1} parent=1 // pred_check_branch
      %60 = sbr.rel (0) target = $region33
    $region32: #{mlp_forward.1} parent=1 // pred_region
      _
    $region33: #{mlp_forward.1} parent=1 // pred_fallthru
      _
    // Predicated region
    $region34: #{mlp_forward.1} parent=1 // pred_check
      _
    $region35: #{mlp_forward.1} parent=1 // pred_check_branch
      %62 = sbr.rel (0) target = $region37
    $region36: #{mlp_forward.1} parent=1 // pred_region
      %63 = dma.done [#allocation3], 4096
    $region37: #{mlp_forward.1} parent=1 // pred_fallthru
      _
    // Predicated region
    $region38: #{mlp_forward.1} parent=1 // pred_check
      _
    $region39: #{mlp_forward.1} parent=1 // pred_check_branch
      %65 = sbr.rel (0) target = $region41
    $region40: #{mlp_forward.1} parent=1 // pred_region
      %66 = dma.done [#allocation5], 2048
    $region41: #{mlp_forward.1} parent=1 // pred_fallthru
      _
    // Predicated region
    $region42: #{mlp_forward.1} parent=1 // pred_check
      _
    $region43: #{mlp_forward.1} parent=1 // pred_check_branch
      %68 = sbr.rel (0) target = $region45
    $region44: #{mlp_forward.1} parent=1 // pred_region
      %69 = dma.done [#allocation5], 2048
    $region45: #{mlp_forward.1} parent=1 // pred_fallthru
      _
    %v70 = vld [vmem:[%s0] sm:$0x3]
    %v71 = vld [vmem:[%s3] sm:$0x1]
    %v72 = vld [vmem:[%s4] sm:$0x1]
    %v73 = vld [vmem:[#allocation4] sm:$0xff]
    %v74 = vld [vmem:[#allocation4 + $0x8] sm:$0xff]
    %v75 = vld [vmem:[#allocation4 + $0x10] sm:$0xff]
    %v76 = vld [vmem:[#allocation4 + $0x18] sm:$0xff]
    %v77 = vld [vmem:[#allocation4 + $0x20] sm:$0xff]
    %v78 = vld [vmem:[#allocation4 + $0x28] sm:$0xff]
    %v79 = vld [vmem:[#allocation4 + $0x30] sm:$0xff]
    %v80 = vld [vmem:[#allocation4 + $0x38] sm:$0xff]
    %v81 = vld [vmem:[#allocation4 + $0x40] sm:$0xff]
    %v82 = vld [vmem:[#allocation4 + $0x48] sm:$0xff]
    %v83 = vld [vmem:[#allocation4 + $0x50] sm:$0xff]
    %v84 = vld [vmem:[#allocation4 + $0x58] sm:$0xff]
    %v85 = vld [vmem:[#allocation4 + $0x60] sm:$0xff]
    %v86 = vld [vmem:[#allocation4 + $0x68] sm:$0xff]
    %v87 = vld [vmem:[#allocation4 + $0x70] sm:$0xff]
    %v88 = vld [vmem:[#allocation4 + $0x78] sm:$0xff]
    %v89 = vld [vmem:[#allocation2] sm:$0xff]
    %v90 = vld [vmem:[#allocation2 + $0x8] sm:$0xff]
    %v91 = vld [vmem:[#allocation2 + $0x10] sm:$0xff]
    %v92 = vld [vmem:[#allocation2 + $0x18] sm:$0xff]
    %v93 = vld [vmem:[#allocation2 + $0x20] sm:$0xff]
    %v94 = vld [vmem:[#allocation2 + $0x28] sm:$0xff]
    %v95 = vld [vmem:[#allocation2 + $0x30] sm:$0xff]
    %v96 = vld [vmem:[#allocation2 + $0x38] sm:$0xff]
    %v97 = vld [vmem:[#allocation2 + $0x40] sm:$0xff]
    %v98 = vld [vmem:[#allocation2 + $0x48] sm:$0xff]
    %v99 = vld [vmem:[#allocation2 + $0x50] sm:$0xff]
    %v100 = vld [vmem:[#allocation2 + $0x58] sm:$0xff]
    %v101 = vld [vmem:[#allocation2 + $0x60] sm:$0xff]
    %v102 = vld [vmem:[#allocation2 + $0x68] sm:$0xff]
    %v103 = vld [vmem:[#allocation2 + $0x70] sm:$0xff]
    %v104 = vld [vmem:[#allocation2 + $0x78] sm:$0xff]
    %v105 = vld [vmem:[%s2] sm:$0x1]
    %v107 = vlaneseq
    %v108 = vshrl.u32 %v107, 7
    %v109 = vsub.s32 0, %v108
    %v110 = vrot.slane %v105, %v109
    %112 = vmatprep.subr.mxu0 0.0
    %113 = vmatpush1.msra.mxu0 %v89
    %114 = vmatprep.subr.mxu0 0.0
    %115 = vmatpush1.msra.mxu0 %v90
    %116 = vmatprep.subr.mxu0 0.0
    %117 = vmatpush1.msra.mxu0 %v91
    %118 = vmatprep.subr.mxu0 0.0
    %119 = vmatpush1.msra.mxu0 %v92
    %120 = vmatprep.subr.mxu0 0.0
    %121 = vmatpush1.msra.mxu0 %v93
    %122 = vmatprep.subr.mxu0 0.0
    %123 = vmatpush1.msra.mxu0 %v94
    %124 = vmatprep.subr.mxu0 0.0
    %125 = vmatpush1.msra.mxu0 %v95
    %126 = vmatprep.subr.mxu0 0.0
    %127 = vmatpush1.msra.mxu0 %v96
    %128 = vmatprep.subr.mxu0 0.0
    %129 = vmatpush1.msra.mxu0 %v97
    %130 = vmatprep.subr.mxu0 0.0
    %131 = vmatpush1.msra.mxu0 %v98
    %132 = vmatprep.subr.mxu0 0.0
    %133 = vmatpush1.msra.mxu0 %v99
    %134 = vmatprep.subr.mxu0 0.0
    %135 = vmatpush1.msra.mxu0 %v100
    %136 = vmatprep.subr.mxu0 0.0
    %137 = vmatpush1.msra.mxu0 %v101
    %138 = vmatprep.subr.mxu0 0.0
    %139 = vmatpush1.msra.mxu0 %v102
    %140 = vmatprep.subr.mxu0 0.0
    %141 = vmatpush1.msra.mxu0 %v103
    %142 = vmatprep.subr.mxu0 0.0
    %143 = vmatpush1.msra.mxu0 %v104
    %144 = vmatprep.subr.mxu0 0.0
    %145 = vmatpush1.msra.mxu0 0.0
    %146 = vmatprep.subr.mxu0 0.0
    %147 = vmatpush1.msra.mxu0 0.0
    %148 = vmatprep.subr.mxu0 0.0
    %149 = vmatpush1.msra.mxu0 0.0
    %150 = vmatprep.subr.mxu0 0.0
    %151 = vmatpush1.msra.mxu0 0.0
    %152 = vmatprep.subr.mxu0 0.0
    %153 = vmatpush1.msra.mxu0 0.0
    %154 = vmatprep.subr.mxu0 0.0
    %155 = vmatpush1.msra.mxu0 0.0
    %156 = vmatprep.subr.mxu0 0.0
    %157 = vmatpush1.msra.mxu0 0.0
    %158 = vmatprep.subr.mxu0 0.0
    %159 = vmatpush1.msra.mxu0 0.0
    %160 = vmatprep.subr.mxu0 0.0
    %161 = vmatpush1.msra.mxu0 0.0
    %162 = vmatprep.subr.mxu0 0.0
    %163 = vmatpush1.msra.mxu0 0.0
    %164 = vmatprep.subr.mxu0 0.0
    %165 = vmatpush1.msra.mxu0 0.0
    %166 = vmatprep.subr.mxu0 0.0
    %167 = vmatpush1.msra.mxu0 0.0
    %168 = vmatprep.subr.mxu0 0.0
    %169 = vmatpush1.msra.mxu0 0.0
    %170 = vmatprep.subr.mxu0 0.0
    %171 = vmatpush1.msra.mxu0 0.0
    %172 = vmatprep.subr.mxu0 0.0
    %173 = vmatpush1.msra.mxu0 0.0
    %174 = vmatprep.subr.mxu0 0.0
    %175 = vmatpush1.msra.mxu0 0.0
    %176 = vmatprep.mubr.f32.mxu0 0.0
    %177 = vmatmul.mubr.f32.gmra.mrb[0].mxu0 %v70
    %v178 = vpop.f32.mrb[0].mxu0
    %v179 = vadd.f32 %v110, %v178
    %v180 = vpop.f32.mrb[0].mxu0
    %181 = vdwg.mxu0
    %v182 = vmul.f32 %v179, 0.5
    %v183 = vmul.f32 %v179, 0.70710677
    %v184 = vand.u32 2147483647, %v183
    %v185 = vmul.f32 %v184, 0.3275911
    %v186 = vadd.f32 %v185, 1.0
    %v187 = vrcp.pop %v186
    %v188 = vmul.f32 1.0, %v187
    %v189 = vmul.f32 %v188, 1.0614054
    %v190 = vsub.f32 %v189, 1.4531521
    %v191 = vmul.f32 %v190, %v188
    %v192 = vadd.f32 %v191, 1.4214138
    %v193 = vmul.f32 %v192, %v188
    %v194 = vsub.f32 %v193, 0.28449672
    %v195 = vmul.f32 %v194, %v188
    %v196 = vadd.f32 %v195, 0.2548296
    %v197 = vmul.f32 %v196, %v188
    %v198 = vsub.f32 0.0, %v184
    %v199 = vmul.f32 %v198, %v184
    %v200 = vmul.f32 %v199, 1.442695
    %v201 = vpow.pop %v200
    %v202 = vmul.f32 %v197, %v201
    %v203 = vsub.f32 1.0, %v202
    %vm204 = vcmp.ge.f32.partialorder %v183, 0.0
    %v205 = vsub.f32 0.0, %v203
    %v206 = vsel %vm204, %v203, %v205
    %v207 = vadd.f32 %v206, 1.0
    %v208 = vmul.f32 %v182, %v207
    %209 = vmatprep.subr.mxu0 0.0
    %210 = vmatpush1.msra.mxu0 %v73
    %211 = vmatprep.subr.mxu0 0.0
    %212 = vmatpush1.msra.mxu0 %v74
    %213 = vmatprep.subr.mxu0 0.0
    %214 = vmatpush1.msra.mxu0 %v75
    %215 = vmatprep.subr.mxu0 0.0
    %216 = vmatpush1.msra.mxu0 %v76
    %217 = vmatprep.subr.mxu0 0.0
    %218 = vmatpush1.msra.mxu0 %v77
    %219 = vmatprep.subr.mxu0 0.0
    %220 = vmatpush1.msra.mxu0 %v78
    %221 = vmatprep.subr.mxu0 0.0
    %222 = vmatpush1.msra.mxu0 %v79
    %223 = vmatprep.subr.mxu0 0.0
    %224 = vmatpush1.msra.mxu0 %v80
    %225 = vmatprep.subr.mxu0 0.0
    %226 = vmatpush1.msra.mxu0 %v81
    %227 = vmatprep.subr.mxu0 0.0
    %228 = vmatpush1.msra.mxu0 %v82
    %229 = vmatprep.subr.mxu0 0.0
    %230 = vmatpush1.msra.mxu0 %v83
    %231 = vmatprep.subr.mxu0 0.0
    %232 = vmatpush1.msra.mxu0 %v84
    %233 = vmatprep.subr.mxu0 0.0
    %234 = vmatpush1.msra.mxu0 %v85
    %235 = vmatprep.subr.mxu0 0.0
    %236 = vmatpush1.msra.mxu0 %v86
    %237 = vmatprep.subr.mxu0 0.0
    %238 = vmatpush1.msra.mxu0 %v87
    %239 = vmatprep.subr.mxu0 0.0
    %240 = vmatpush1.msra.mxu0 %v88
    %241 = vmatprep.subr.mxu0 0.0
    %242 = vmatpush1.msra.mxu0 0.0
    %243 = vmatprep.subr.mxu0 0.0
    %244 = vmatpush1.msra.mxu0 0.0
    %245 = vmatprep.subr.mxu0 0.0
    %246 = vmatpush1.msra.mxu0 0.0
    %247 = vmatprep.subr.mxu0 0.0
    %248 = vmatpush1.msra.mxu0 0.0
    %249 = vmatprep.subr.mxu0 0.0
    %250 = vmatpush1.msra.mxu0 0.0
    %251 = vmatprep.subr.mxu0 0.0
    %252 = vmatpush1.msra.mxu0 0.0
    %253 = vmatprep.subr.mxu0 0.0
    %254 = vmatpush1.msra.mxu0 0.0
    %255 = vmatprep.subr.mxu0 0.0
    %256 = vmatpush1.msra.mxu0 0.0
    %257 = vmatprep.subr.mxu0 0.0
    %258 = vmatpush1.msra.mxu0 0.0
    %259 = vmatprep.subr.mxu0 0.0
    %260 = vmatpush1.msra.mxu0 0.0
    %261 = vmatprep.subr.mxu0 0.0
    %262 = vmatpush1.msra.mxu0 0.0
    %263 = vmatprep.subr.mxu0 0.0
    %264 = vmatpush1.msra.mxu0 0.0
    %265 = vmatprep.subr.mxu0 0.0
    %266 = vmatpush1.msra.mxu0 0.0
    %267 = vmatprep.subr.mxu0 0.0
    %268 = vmatpush1.msra.mxu0 0.0
    %269 = vmatprep.subr.mxu0 0.0
    %270 = vmatpush1.msra.mxu0 0.0
    %271 = vmatprep.subr.mxu0 0.0
    %272 = vmatpush1.msra.mxu0 0.0
    %273 = vmatprep.mubr.f32.mxu0 0.0
    %274 = vmatmul.mubr.f32.gmra.mrb[0].mxu0 %v208
    %v275 = vpop.f32.mrb[0].mxu0
    %v276 = vadd.f32 0.0, %v275
    %v277 = vpop.f32.mrb[0].mxu0
    %278 = vdwg.mxu0
    %v279 = vsub.f32 %v208, %v276
    %v280 = vmul.f32 %v279, %v279
    %281 = vmatprep.subr.mxu0 0.0
    %282 = vmatpush1.msra.mxu0 %v73
    %283 = vmatprep.subr.mxu0 0.0
    %284 = vmatpush1.msra.mxu0 %v74
    %285 = vmatprep.subr.mxu0 0.0
    %286 = vmatpush1.msra.mxu0 %v75
    %287 = vmatprep.subr.mxu0 0.0
    %288 = vmatpush1.msra.mxu0 %v76
    %289 = vmatprep.subr.mxu0 0.0
    %290 = vmatpush1.msra.mxu0 %v77
    %291 = vmatprep.subr.mxu0 0.0
    %292 = vmatpush1.msra.mxu0 %v78
    %293 = vmatprep.subr.mxu0 0.0
    %294 = vmatpush1.msra.mxu0 %v79
    %295 = vmatprep.subr.mxu0 0.0
    %296 = vmatpush1.msra.mxu0 %v80
    %297 = vmatprep.subr.mxu0 0.0
    %298 = vmatpush1.msra.mxu0 %v81
    %299 = vmatprep.subr.mxu0 0.0
    %300 = vmatpush1.msra.mxu0 %v82
    %301 = vmatprep.subr.mxu0 0.0
    %302 = vmatpush1.msra.mxu0 %v83
    %303 = vmatprep.subr.mxu0 0.0
    %304 = vmatpush1.msra.mxu0 %v84
    %305 = vmatprep.subr.mxu0 0.0
    %306 = vmatpush1.msra.mxu0 %v85
    %307 = vmatprep.subr.mxu0 0.0
    %308 = vmatpush1.msra.mxu0 %v86
    %309 = vmatprep.subr.mxu0 0.0
    %310 = vmatpush1.msra.mxu0 %v87
    %311 = vmatprep.subr.mxu0 0.0
    %312 = vmatpush1.msra.mxu0 %v88
    %313 = vmatprep.subr.mxu0 0.0
    %314 = vmatpush1.msra.mxu0 0.0
    %315 = vmatprep.subr.mxu0 0.0
    %316 = vmatpush1.msra.mxu0 0.0
    %317 = vmatprep.subr.mxu0 0.0
    %318 = vmatpush1.msra.mxu0 0.0
    %319 = vmatprep.subr.mxu0 0.0
    %320 = vmatpush1.msra.mxu0 0.0
    %321 = vmatprep.subr.mxu0 0.0
    %322 = vmatpush1.msra.mxu0 0.0
    %323 = vmatprep.subr.mxu0 0.0
    %324 = vmatpush1.msra.mxu0 0.0
    %325 = vmatprep.subr.mxu0 0.0
    %326 = vmatpush1.msra.mxu0 0.0
    %327 = vmatprep.subr.mxu0 0.0
    %328 = vmatpush1.msra.mxu0 0.0
    %329 = vmatprep.subr.mxu0 0.0
    %330 = vmatpush1.msra.mxu0 0.0
    %331 = vmatprep.subr.mxu0 0.0
    %332 = vmatpush1.msra.mxu0 0.0
    %333 = vmatprep.subr.mxu0 0.0
    %334 = vmatpush1.msra.mxu0 0.0
    %335 = vmatprep.subr.mxu0 0.0
    %336 = vmatpush1.msra.mxu0 0.0
    %337 = vmatprep.subr.mxu0 0.0
    %338 = vmatpush1.msra.mxu0 0.0
    %339 = vmatprep.subr.mxu0 0.0
    %340 = vmatpush1.msra.mxu0 0.0
    %341 = vmatprep.subr.mxu0 0.0
    %342 = vmatpush1.msra.mxu0 0.0
    %343 = vmatprep.subr.mxu0 0.0
    %344 = vmatpush1.msra.mxu0 0.0
    %345 = vmatprep.mubr.f32.mxu0 0.0
    %346 = vmatmul.mubr.f32.gmra.mrb[0].mxu0 %v280
    %v347 = vpop.f32.mrb[0].mxu0
    %v348 = vadd.f32 1e-05, %v347
    %v349 = vpop.f32.mrb[0].mxu0
    %350 = vdwg.mxu0
    %v351 = vrsqrt.pop %v348
    %v352 = vmul.f32 %v279, %v351
    %v354 = vlaneseq
    %v355 = vshrl.u32 %v354, 7
    %v356 = vsub.s32 0, %v355
    %v357 = vrot.slane %v71, %v356
    %v359 = vmul.f32 %v352, %v357
    %v361 = vlaneseq
    %v362 = vshrl.u32 %v361, 7
    %v363 = vsub.s32 0, %v362
    %v364 = vrot.slane %v72, %v363
    %v366 = vadd.f32 %v359, %v364
    %v367 = vadd.f32 %v366, %v70
    %s368 = scalar_lea.vmem [#allocation2], 128
    %v369 = vld [vmem:[%s368] sm:$0xff]
    %v370 = vld [vmem:[%s368 + $0x8] sm:$0xff]
    %v371 = vld [vmem:[%s368 + $0x10] sm:$0xff]
    %v372 = vld [vmem:[%s368 + $0x18] sm:$0xff]
    %v373 = vld [vmem:[%s368 + $0x20] sm:$0xff]
    %v374 = vld [vmem:[%s368 + $0x28] sm:$0xff]
    %v375 = vld [vmem:[%s368 + $0x30] sm:$0xff]
    %v376 = vld [vmem:[%s368 + $0x38] sm:$0xff]
    %v377 = vld [vmem:[%s368 + $0x40] sm:$0xff]
    %v378 = vld [vmem:[%s368 + $0x48] sm:$0xff]
    %v379 = vld [vmem:[%s368 + $0x50] sm:$0xff]
    %v380 = vld [vmem:[%s368 + $0x58] sm:$0xff]
    %v381 = vld [vmem:[%s368 + $0x60] sm:$0xff]
    %v382 = vld [vmem:[%s368 + $0x68] sm:$0xff]
    %v383 = vld [vmem:[%s368 + $0x70] sm:$0xff]
    %v384 = vld [vmem:[%s368 + $0x78] sm:$0xff]
    %s385 = scalar_lea.vmem %s2, 1
    %v386 = vld [vmem:[%s385] sm:$0x1]
    %v388 = vlaneseq
    %v389 = vshrl.u32 %v388, 7
    %v390 = vsub.s32 0, %v389
    %v391 = vrot.slane %v386, %v390
    %393 = vmatprep.subr.mxu0 0.0
    %394 = vmatpush1.msra.mxu0 %v369
    %395 = vmatprep.subr.mxu0 0.0
    %396 = vmatpush1.msra.mxu0 %v370
    %397 = vmatprep.subr.mxu0 0.0
    %398 = vmatpush1.msra.mxu0 %v371
    %399 = vmatprep.subr.mxu0 0.0
    %400 = vmatpush1.msra.mxu0 %v372
    %401 = vmatprep.subr.mxu0 0.0
    %402 = vmatpush1.msra.mxu0 %v373
    %403 = vmatprep.subr.mxu0 0.0
    %404 = vmatpush1.msra.mxu0 %v374
    %405 = vmatprep.subr.mxu0 0.0
    %406 = vmatpush1.msra.mxu0 %v375
    %407 = vmatprep.subr.mxu0 0.0
    %408 = vmatpush1.msra.mxu0 %v376
    %409 = vmatprep.subr.mxu0 0.0
    %410 = vmatpush1.msra.mxu0 %v377
    %411 = vmatprep.subr.mxu0 0.0
    %412 = vmatpush1.msra.mxu0 %v378
    %413 = vmatprep.subr.mxu0 0.0
    %414 = vmatpush1.msra.mxu0 %v379
    %415 = vmatprep.subr.mxu0 0.0
    %416 = vmatpush1.msra.mxu0 %v380
    %417 = vmatprep.subr.mxu0 0.0
    %418 = vmatpush1.msra.mxu0 %v381
    %419 = vmatprep.subr.mxu0 0.0
    %420 = vmatpush1.msra.mxu0 %v382
    %421 = vmatprep.subr.mxu0 0.0
    %422 = vmatpush1.msra.mxu0 %v383
    %423 = vmatprep.subr.mxu0 0.0
    %424 = vmatpush1.msra.mxu0 %v384
    %425 = vmatprep.subr.mxu0 0.0
    %426 = vmatpush1.msra.mxu0 0.0
    %427 = vmatprep.subr.mxu0 0.0
    %428 = vmatpush1.msra.mxu0 0.0
    %429 = vmatprep.subr.mxu0 0.0
    %430 = vmatpush1.msra.mxu0 0.0
    %431 = vmatprep.subr.mxu0 0.0
    %432 = vmatpush1.msra.mxu0 0.0
    %433 = vmatprep.subr.mxu0 0.0
    %434 = vmatpush1.msra.mxu0 0.0
    %435 = vmatprep.subr.mxu0 0.0
    %436 = vmatpush1.msra.mxu0 0.0
    %437 = vmatprep.subr.mxu0 0.0
    %438 = vmatpush1.msra.mxu0 0.0
    %439 = vmatprep.subr.mxu0 0.0
    %440 = vmatpush1.msra.mxu0 0.0
    %441 = vmatprep.subr.mxu0 0.0
    %442 = vmatpush1.msra.mxu0 0.0
    %443 = vmatprep.subr.mxu0 0.0
    %444 = vmatpush1.msra.mxu0 0.0
    %445 = vmatprep.subr.mxu0 0.0
    %446 = vmatpush1.msra.mxu0 0.0
    %447 = vmatprep.subr.mxu0 0.0
    %448 = vmatpush1.msra.mxu0 0.0
    %449 = vmatprep.subr.mxu0 0.0
    %450 = vmatpush1.msra.mxu0 0.0
    %451 = vmatprep.subr.mxu0 0.0
    %452 = vmatpush1.msra.mxu0 0.0
    %453 = vmatprep.subr.mxu0 0.0
    %454 = vmatpush1.msra.mxu0 0.0
    %455 = vmatprep.subr.mxu0 0.0
    %456 = vmatpush1.msra.mxu0 0.0
    %457 = vmatprep.mubr.f32.mxu0 0.0
    %458 = vmatmul.mubr.f32.gmra.mrb[0].mxu0 %v367
    %v459 = vpop.f32.mrb[0].mxu0
    %v460 = vadd.f32 %v391, %v459
    %v461 = vpop.f32.mrb[0].mxu0
    %462 = vdwg.mxu0
    %v463 = vmul.f32 %v460, 0.5
    %v464 = vmul.f32 %v460, 0.70710677
    %v465 = vand.u32 2147483647, %v464
    %v466 = vmul.f32 %v465, 0.3275911
    %v467 = vadd.f32 %v466, 1.0
    %v468 = vrcp.pop %v467
    %v469 = vmul.f32 1.0, %v468
    %v470 = vmul.f32 %v469, 1.0614054
    %v471 = vsub.f32 %v470, 1.4531521
    %v472 = vmul.f32 %v471, %v469
    %v473 = vadd.f32 %v472, 1.4214138
    %v474 = vmul.f32 %v473, %v469
    %v475 = vsub.f32 %v474, 0.28449672
    %v476 = vmul.f32 %v475, %v469
    %v477 = vadd.f32 %v476, 0.2548296
    %v478 = vmul.f32 %v477, %v469
    %v479 = vsub.f32 0.0, %v465
    %v480 = vmul.f32 %v479, %v465
    %v481 = vmul.f32 %v480, 1.442695
    %v482 = vpow.pop %v481
    %v483 = vmul.f32 %v478, %v482
    %v484 = vsub.f32 1.0, %v483
    %vm485 = vcmp.ge.f32.partialorder %v464, 0.0
    %v486 = vsub.f32 0.0, %v484
    %v487 = vsel %vm485, %v484, %v486
    %v488 = vadd.f32 %v487, 1.0
    %v489 = vmul.f32 %v463, %v488
    %490 = vmatprep.subr.mxu0 0.0
    %491 = vmatpush1.msra.mxu0 %v73
    %492 = vmatprep.subr.mxu0 0.0
    %493 = vmatpush1.msra.mxu0 %v74
    %494 = vmatprep.subr.mxu0 0.0
    %495 = vmatpush1.msra.mxu0 %v75
    %496 = vmatprep.subr.mxu0 0.0
    %497 = vmatpush1.msra.mxu0 %v76
    %498 = vmatprep.subr.mxu0 0.0
    %499 = vmatpush1.msra.mxu0 %v77
    %500 = vmatprep.subr.mxu0 0.0
    %501 = vmatpush1.msra.mxu0 %v78
    %502 = vmatprep.subr.mxu0 0.0
    %503 = vmatpush1.msra.mxu0 %v79
    %504 = vmatprep.subr.mxu0 0.0
    %505 = vmatpush1.msra.mxu0 %v80
    %506 = vmatprep.subr.mxu0 0.0
    %507 = vmatpush1.msra.mxu0 %v81
    %508 = vmatprep.subr.mxu0 0.0
    %509 = vmatpush1.msra.mxu0 %v82
    %510 = vmatprep.subr.mxu0 0.0
    %511 = vmatpush1.msra.mxu0 %v83
    %512 = vmatprep.subr.mxu0 0.0
    %513 = vmatpush1.msra.mxu0 %v84
    %514 = vmatprep.subr.mxu0 0.0
    %515 = vmatpush1.msra.mxu0 %v85
    %516 = vmatprep.subr.mxu0 0.0
    %517 = vmatpush1.msra.mxu0 %v86
    %518 = vmatprep.subr.mxu0 0.0
    %519 = vmatpush1.msra.mxu0 %v87
    %520 = vmatprep.subr.mxu0 0.0
    %521 = vmatpush1.msra.mxu0 %v88
    %522 = vmatprep.subr.mxu0 0.0
    %523 = vmatpush1.msra.mxu0 0.0
    %524 = vmatprep.subr.mxu0 0.0
    %525 = vmatpush1.msra.mxu0 0.0
    %526 = vmatprep.subr.mxu0 0.0
    %527 = vmatpush1.msra.mxu0 0.0
    %528 = vmatprep.subr.mxu0 0.0
    %529 = vmatpush1.msra.mxu0 0.0
    %530 = vmatprep.subr.mxu0 0.0
    %531 = vmatpush1.msra.mxu0 0.0
    %532 = vmatprep.subr.mxu0 0.0
    %533 = vmatpush1.msra.mxu0 0.0
    %534 = vmatprep.subr.mxu0 0.0
    %535 = vmatpush1.msra.mxu0 0.0
    %536 = vmatprep.subr.mxu0 0.0
    %537 = vmatpush1.msra.mxu0 0.0
    %538 = vmatprep.subr.mxu0 0.0
    %539 = vmatpush1.msra.mxu0 0.0
    %540 = vmatprep.subr.mxu0 0.0
    %541 = vmatpush1.msra.mxu0 0.0
    %542 = vmatprep.subr.mxu0 0.0
    %543 = vmatpush1.msra.mxu0 0.0
    %544 = vmatprep.subr.mxu0 0.0
    %545 = vmatpush1.msra.mxu0 0.0
    %546 = vmatprep.subr.mxu0 0.0
    %547 = vmatpush1.msra.mxu0 0.0
    %548 = vmatprep.subr.mxu0 0.0
    %549 = vmatpush1.msra.mxu0 0.0
    %550 = vmatprep.subr.mxu0 0.0
    %551 = vmatpush1.msra.mxu0 0.0
    %552 = vmatprep.subr.mxu0 0.0
    %553 = vmatpush1.msra.mxu0 0.0
    %554 = vmatprep.mubr.f32.mxu0 0.0
    %555 = vmatmul.mubr.f32.gmra.mrb[0].mxu0 %v489
    %v556 = vpop.f32.mrb[0].mxu0
    %v557 = vadd.f32 0.0, %v556
    %v558 = vpop.f32.mrb[0].mxu0
    %559 = vdwg.mxu0
    %v560 = vsub.f32 %v489, %v557
    %v561 = vmul.f32 %v560, %v560
    %562 = vmatprep.subr.mxu0 0.0
    %563 = vmatpush1.msra.mxu0 %v73
    %564 = vmatprep.subr.mxu0 0.0
    %565 = vmatpush1.msra.mxu0 %v74
    %566 = vmatprep.subr.mxu0 0.0
    %567 = vmatpush1.msra.mxu0 %v75
    %568 = vmatprep.subr.mxu0 0.0
    %569 = vmatpush1.msra.mxu0 %v76
    %570 = vmatprep.subr.mxu0 0.0
    %571 = vmatpush1.msra.mxu0 %v77
    %572 = vmatprep.subr.mxu0 0.0
    %573 = vmatpush1.msra.mxu0 %v78
    %574 = vmatprep.subr.mxu0 0.0
    %575 = vmatpush1.msra.mxu0 %v79
    %576 = vmatprep.subr.mxu0 0.0
    %577 = vmatpush1.msra.mxu0 %v80
    %578 = vmatprep.subr.mxu0 0.0
    %579 = vmatpush1.msra.mxu0 %v81
    %580 = vmatprep.subr.mxu0 0.0
    %581 = vmatpush1.msra.mxu0 %v82
    %582 = vmatprep.subr.mxu0 0.0
    %583 = vmatpush1.msra.mxu0 %v83
    %584 = vmatprep.subr.mxu0 0.0
    %585 = vmatpush1.msra.mxu0 %v84
    %586 = vmatprep.subr.mxu0 0.0
    %587 = vmatpush1.msra.mxu0 %v85
    %588 = vmatprep.subr.mxu0 0.0
    %589 = vmatpush1.msra.mxu0 %v86
    %590 = vmatprep.subr.mxu0 0.0
    %591 = vmatpush1.msra.mxu0 %v87
    %592 = vmatprep.subr.mxu0 0.0
    %593 = vmatpush1.msra.mxu0 %v88
    %594 = vmatprep.subr.mxu0 0.0
    %595 = vmatpush1.msra.mxu0 0.0
    %596 = vmatprep.subr.mxu0 0.0
    %597 = vmatpush1.msra.mxu0 0.0
    %598 = vmatprep.subr.mxu0 0.0
    %599 = vmatpush1.msra.mxu0 0.0
    %600 = vmatprep.subr.mxu0 0.0
    %601 = vmatpush1.msra.mxu0 0.0
    %602 = vmatprep.subr.mxu0 0.0
    %603 = vmatpush1.msra.mxu0 0.0
    %604 = vmatprep.subr.mxu0 0.0
    %605 = vmatpush1.msra.mxu0 0.0
    %606 = vmatprep.subr.mxu0 0.0
    %607 = vmatpush1.msra.mxu0 0.0
    %608 = vmatprep.subr.mxu0 0.0
    %609 = vmatpush1.msra.mxu0 0.0
    %610 = vmatprep.subr.mxu0 0.0
    %611 = vmatpush1.msra.mxu0 0.0
    %612 = vmatprep.subr.mxu0 0.0
    %613 = vmatpush1.msra.mxu0 0.0
    %614 = vmatprep.subr.mxu0 0.0
    %615 = vmatpush1.msra.mxu0 0.0
    %616 = vmatprep.subr.mxu0 0.0
    %617 = vmatpush1.msra.mxu0 0.0
    %618 = vmatprep.subr.mxu0 0.0
    %619 = vmatpush1.msra.mxu0 0.0
    %620 = vmatprep.subr.mxu0 0.0
    %621 = vmatpush1.msra.mxu0 0.0
    %622 = vmatprep.subr.mxu0 0.0
    %623 = vmatpush1.msra.mxu0 0.0
    %624 = vmatprep.subr.mxu0 0.0
    %625 = vmatpush1.msra.mxu0 0.0
    %626 = vmatprep.mubr.f32.mxu0 0.0
    %627 = vmatmul.mubr.f32.gmra.mrb[0].mxu0 %v561
    %v628 = vpop.f32.mrb[0].mxu0
    %v629 = vadd.f32 1e-05, %v628
    %v630 = vpop.f32.mrb[0].mxu0
    %631 = vdwg.mxu0
    %v632 = vrsqrt.pop %v629
    %v633 = vmul.f32 %v560, %v632
    %v634 = vmul.f32 %v633, %v357
    %v635 = vadd.f32 %v634, %v364
    %v636 = vadd.f32 %v635, %v367
    %v637 = vld [vmem:[#allocation6] sm:$0xff]
    %v638 = vld [vmem:[#allocation6 + $0x8] sm:$0xff]
    %v639 = vld [vmem:[#allocation6 + $0x10] sm:$0xff]
    %v640 = vld [vmem:[#allocation6 + $0x18] sm:$0xff]
    %v641 = vld [vmem:[#allocation6 + $0x20] sm:$0xff]
    %v642 = vld [vmem:[#allocation6 + $0x28] sm:$0xff]
    %v643 = vld [vmem:[#allocation6 + $0x30] sm:$0xff]
    %v644 = vld [vmem:[#allocation6 + $0x38] sm:$0xff]
    %v645 = vld [vmem:[#allocation6 + $0x40] sm:$0xff]
    %v646 = vld [vmem:[#allocation6 + $0x48] sm:$0xff]
    %v647 = vld [vmem:[#allocation6 + $0x50] sm:$0xff]
    %v648 = vld [vmem:[#allocation6 + $0x58] sm:$0xff]
    %v649 = vld [vmem:[#allocation6 + $0x60] sm:$0xff]
    %v650 = vld [vmem:[#allocation6 + $0x68] sm:$0xff]
    %v651 = vld [vmem:[#allocation6 + $0x70] sm:$0xff]
    %v652 = vld [vmem:[#allocation6 + $0x78] sm:$0xff]
    %v653 = vld [vmem:[%s7] sm:$0x1]
    %v655 = vlaneseq
    %v656 = vshrl.u32 %v655, 7
    %v657 = vsub.s32 0, %v656
    %v658 = vrot.slane %v653, %v657
    %660 = vmatprep.subr.mxu0 0.0
    %661 = vmatpush1.msra.mxu0 %v637
    %662 = vmatprep.subr.mxu0 0.0
    %663 = vmatpush1.msra.mxu0 %v638
    %664 = vmatprep.subr.mxu0 0.0
    %665 = vmatpush1.msra.mxu0 %v639
    %666 = vmatprep.subr.mxu0 0.0
    %667 = vmatpush1.msra.mxu0 %v640
    %668 = vmatprep.subr.mxu0 0.0
    %669 = vmatpush1.msra.mxu0 %v641
    %670 = vmatprep.subr.mxu0 0.0
    %671 = vmatpush1.msra.mxu0 %v642
    %672 = vmatprep.subr.mxu0 0.0
    %673 = vmatpush1.msra.mxu0 %v643
    %674 = vmatprep.subr.mxu0 0.0
    %675 = vmatpush1.msra.mxu0 %v644
    %676 = vmatprep.subr.mxu0 0.0
    %677 = vmatpush1.msra.mxu0 %v645
    %678 = vmatprep.subr.mxu0 0.0
    %679 = vmatpush1.msra.mxu0 %v646
    %680 = vmatprep.subr.mxu0 0.0
    %681 = vmatpush1.msra.mxu0 %v647
    %682 = vmatprep.subr.mxu0 0.0
    %683 = vmatpush1.msra.mxu0 %v648
    %684 = vmatprep.subr.mxu0 0.0
    %685 = vmatpush1.msra.mxu0 %v649
    %686 = vmatprep.subr.mxu0 0.0
    %687 = vmatpush1.msra.mxu0 %v650
    %688 = vmatprep.subr.mxu0 0.0
    %689 = vmatpush1.msra.mxu0 %v651
    %690 = vmatprep.subr.mxu0 0.0
    %691 = vmatpush1.msra.mxu0 %v652
    %692 = vmatprep.subr.mxu0 0.0
    %693 = vmatpush1.msra.mxu0 0.0
    %694 = vmatprep.subr.mxu0 0.0
    %695 = vmatpush1.msra.mxu0 0.0
    %696 = vmatprep.subr.mxu0 0.0
    %697 = vmatpush1.msra.mxu0 0.0
    %698 = vmatprep.subr.mxu0 0.0
    %699 = vmatpush1.msra.mxu0 0.0
    %700 = vmatprep.subr.mxu0 0.0
    %701 = vmatpush1.msra.mxu0 0.0
    %702 = vmatprep.subr.mxu0 0.0
    %703 = vmatpush1.msra.mxu0 0.0
    %704 = vmatprep.subr.mxu0 0.0
    %705 = vmatpush1.msra.mxu0 0.0
    %706 = vmatprep.subr.mxu0 0.0
    %707 = vmatpush1.msra.mxu0 0.0
    %708 = vmatprep.subr.mxu0 0.0
    %709 = vmatpush1.msra.mxu0 0.0
    %710 = vmatprep.subr.mxu0 0.0
    %711 = vmatpush1.msra.mxu0 0.0
    %712 = vmatprep.subr.mxu0 0.0
    %713 = vmatpush1.msra.mxu0 0.0
    %714 = vmatprep.subr.mxu0 0.0
    %715 = vmatpush1.msra.mxu0 0.0
    %716 = vmatprep.subr.mxu0 0.0
    %717 = vmatpush1.msra.mxu0 0.0
    %718 = vmatprep.subr.mxu0 0.0
    %719 = vmatpush1.msra.mxu0 0.0
    %720 = vmatprep.subr.mxu0 0.0
    %721 = vmatpush1.msra.mxu0 0.0
    %722 = vmatprep.subr.mxu0 0.0
    %723 = vmatpush1.msra.mxu0 0.0
    %724 = vmatprep.mubr.f32.mxu0 0.0
    %725 = vmatmul.mubr.f32.gmra.mrb[0].mxu0 %v636
    %v726 = vpop.f32.mrb[0].mxu0
    %v727 = vadd.f32 %v658, %v726
    %v728 = vpop.f32.mrb[0].mxu0
    %729 = vdwg.mxu0
    %730 = vst [vmem:[%s8] sm:$0x3] %v727
    // Predicated region
    $region46: #{mlp_forward.1} parent=1 // pred_check
      _
    $region47: #{mlp_forward.1} parent=1 // pred_check_branch
      %732 = sbr.rel (0) target = $region49
    $region48: #{mlp_forward.1} parent=1 // pred_region
      _
    $region49: #{mlp_forward.1} parent=1 // pred_fallthru
      _
    // Predicated region
    $region50: #{mlp_forward.1} parent=1 // pred_check
      _
    $region51: #{mlp_forward.1} parent=1 // pred_check_branch
      %734 = sbr.rel (0) target = $region53
    $region52: #{mlp_forward.1} parent=1 // pred_region
      _
    $region53: #{mlp_forward.1} parent=1 // pred_fallthru
      _
    %735 = vsyncpa [#allocation3], 1
    %736 = vsyncpa [#allocation5], 1

</llo_original>
